<compile_context>
chip_gen: v6e
topology: v6e:2x2x1
jax: 0.10.0
libtpu: 0.0.40
codegen_flags: <defaults>
</compile_context>

<pallas_src>
import math

import jax
import jax.numpy as jnp
from jax.experimental import pallas as pl
from jax.experimental.pallas import tpu as pltpu


def _fused_conv_kernel(a_ref, b_ref, w_ref, bias_ref, o_ref):
    """One (batch, row-tile) step: fused patch build + 4 shifted matmuls + bias.

    a_ref   : (1, th, Wo+1, 4*C_in)  s2d rows [t*th, t*th+th)
    b_ref   : (1, 1,  Wo+1, 4*C_in)  s2d halo row t*th+th
    w_ref   : (4, 4*C_in, C_out)     per-(dh,dw)-shift weight matrices
    bias_ref: (1, C_out) float32
    o_ref   : (1, th*Wo, C_out)
    """
    th, wo1, k4 = a_ref.shape[1], a_ref.shape[2], a_ref.shape[3]
    wo = wo1 - 1
    c_out = o_ref.shape[2]

    # th+1 s2d rows needed by this tile (k=4, stride=2 -> one-row halo).
    rows = jnp.concatenate([a_ref[0], b_ref[0]], axis=0)       # (th+1, Wo+1, 4*C_in)

    # Bias folded in once (already f32; no per-step cast).
    acc = jnp.broadcast_to(bias_ref[...], (th * wo, c_out))

    for dh in range(2):
        for dw in range(2):
            blk = rows[dh:dh + th, dw:dw + wo, :].reshape(th * wo, k4)
            acc = acc + jnp.dot(blk, w_ref[2 * dh + dw],
                                preferred_element_type=jnp.float32)

    o_ref[0] = acc.astype(o_ref.dtype)


def _choose_row_tile(Ho, Wo, K4, target_rows=1024, budget_bytes=2 << 20):
    """Largest row tile th | Ho with th*Wo matmul rows <= target and a VMEM-sized slab."""
    valid = [d for d in range(1, Ho + 1)
             if Ho % d == 0 and (d == Ho or (d * Wo) % 8 == 0)]
    for d in sorted(valid, reverse=True):
        if d * Wo <= target_rows and (d + 1) * (Wo + 1) * K4 * 4 <= budget_bytes:
            return d
    return min(valid)


def downsample_forward(x, weight, bias, *, target_rows=1024):
    """x: (B, L, C_in), weight: (C_out, C_in, 4, 4), bias: (C_out,) -> (B, L//4, C_out)."""
    B, L, C_in = x.shape
    H = int(round(math.sqrt(L)))
    assert H * H == L, "Downsample expects a square spatial input"
    assert H % 2 == 0, "stride-2 downsample expects even H/W"
    W = H
    C_out = weight.shape[0]
    Ho, Wo = H // 2, W // 2
    K4 = 4 * C_in

    # ---- glue (single fused XLA pass): pad + space-to-depth --------------------
    # xs2d[b, rp, cp, (pr*2+pc)*C_in + ci] = x_padded[b, 2*rp+pr, 2*cp+pc, ci]
    x_img = x.reshape(B, H, W, C_in)
    xp = jnp.pad(x_img, ((0, 0), (1, 1), (1, 1), (0, 0)))
    xs2d = xp.reshape(B, Ho + 1, 2, Wo + 1, 2, C_in)
    xs2d = jnp.transpose(xs2d, (0, 1, 3, 2, 4, 5)).reshape(B, Ho + 1, Wo + 1, K4)

    # Weights regrouped per (dh, dw) shift, rows ordered (pr, pc, ci) to match xs2d.
    w_shift = weight.reshape(C_out, C_in, 2, 2, 2, 2)            # (co, ci, dh, pr, dw, pc)
    w_shift = jnp.transpose(w_shift, (2, 4, 3, 5, 1, 0))         # (dh, dw, pr, pc, ci, co)
    w_shift = w_shift.reshape(4, K4, C_out)
    bias_f32 = bias.astype(jnp.float32).reshape(1, C_out)

    th = _choose_row_tile(Ho, Wo, K4, target_rows)
    T = Ho // th

    itemsize = jnp.dtype(x.dtype).itemsize
    cost = pl.CostEstimate(
        flops=2 * B * Ho * Wo * C_out * 4 * K4,
        transcendentals=0,
        bytes_accessed=(B * (Ho + 1) * (Wo + 1) * K4
                        + 4 * K4 * C_out
                        + B * Ho * Wo * C_out) * itemsize,
    )

    # Explicit VMEM budget (double-buffered tiles + resident weights/bias),
    # kept well under v7x's smaller VMEM; capped at the 32 MiB scoped default.
    tile_bytes = (2 * (th * (Wo + 1) * K4 + (Wo + 1) * K4 + th * Wo * C_out)
                  + 4 * K4 * C_out + 2 * C_out) * 4 + (2 << 20)
    vmem_limit = int(min(32 * 1024 * 1024, max(tile_bytes, 4 * 1024 * 1024)))

    out = pl.pallas_call(
        _fused_conv_kernel,
        out_shape=jax.ShapeDtypeStruct((B, Ho * Wo, C_out), x.dtype),
        grid_spec=pltpu.PrefetchScalarGridSpec(
            num_scalar_prefetch=0,
            grid=(B, T),
            in_specs=[
                # th s2d rows of this tile
                pl.BlockSpec((1, th, Wo + 1, K4), lambda b, t: (b, t, 0, 0)),
                # +1 halo row (block size 1 -> block index == row index)
                pl.BlockSpec((1, 1, Wo + 1, K4), lambda b, t: (b, t * th + th, 0, 0)),
                pl.BlockSpec((4, K4, C_out), lambda b, t: (0, 0, 0)),
                pl.BlockSpec((1, C_out), lambda b, t: (0, 0)),
            ],
            out_specs=pl.BlockSpec((1, th * Wo, C_out), lambda b, t: (b, t, 0)),
        ),
        compiler_params=pltpu.CompilerParams(
            dimension_semantics=("parallel", "parallel"),
            vmem_limit_bytes=vmem_limit,
        ),
        cost_estimate=cost,
    )(xs2d, xs2d, w_shift, bias_f32)

    return out


def _reference(x, weight, bias):
    """Pure-JAX reference mimicking the PyTorch forward exactly (NCHW conv)."""
    B, L, C_in = x.shape
    H = W = int(round(math.sqrt(L)))
    x_nchw = jnp.transpose(x, (0, 2, 1)).reshape(B, C_in, H, W)
    out = jax.lax.conv_general_dilated(
        x_nchw, weight, window_strides=(2, 2), padding=((1, 1), (1, 1)),
        dimension_numbers=("NCHW", "OIHW", "NCHW"),
    ) + bias[None, :, None, None]
    B_, Co, Ho, Wo = out.shape
    return jnp.transpose(out.reshape(B_, Co, Ho * Wo), (0, 2, 1))


if __name__ == "__main__":
    B, H, W = 2, 16, 16
    in_channel, out_channel = 4, 8
    L = H * W

    key = jax.random.PRNGKey(0)
    kx, kw, kb = jax.random.split(key, 3)
    x = jax.random.normal(kx, (B, L, in_channel), dtype=jnp.float32)
    # Deterministic synthetic Conv2d(4,2,1) parameters.
    fan_in = in_channel * 4 * 4
    bound = 1.0 / math.sqrt(fan_in)
    weight = jax.random.uniform(kw, (out_channel, in_channel, 4, 4),
                                dtype=jnp.float32, minval=-bound, maxval=bound)
    bias = jax.random.uniform(kb, (out_channel,), dtype=jnp.float32,
                              minval=-bound, maxval=bound)

    fwd = jax.jit(downsample_forward)   # lets XLA fuse the pad + space-to-depth glue
    out = jax.block_until_ready(fwd(x, weight, bias))

    ref = jax.block_until_ready(_reference(x, weight, bias))
    assert out.shape == (B, L // 4, out_channel), out.shape
    assert jnp.allclose(out, ref, atol=1e-4, rtol=1e-4), "mismatch vs reference conv"

    print("KERNEL_OK")
</pallas_src>

<mosaic_0001>
module attributes {stable_mosaic.version = 11 : i64} {
  func.func @_fused_conv_kernel(%arg0: i32, %arg1: i32, %arg2: memref<1x8x9x16xf32, #tpu.memory_space<vmem>>, %arg3: memref<1x1x9x16xf32, #tpu.memory_space<vmem>>, %arg4: memref<4x16x8xf32, #tpu.memory_space<vmem>>, %arg5: memref<1x8xf32, #tpu.memory_space<vmem>>, %arg6: memref<1x64x8xf32, #tpu.memory_space<vmem>>) attributes {dimension_semantics = [#tpu.dimension_semantics<parallel>, #tpu.dimension_semantics<parallel>], iteration_bounds = array<i64: 2, 1>, scalar_prefetch = 0 : i64, scratch_operands = 0 : i64, tpu.core_type = #tpu.core_type<tc>, window_params = [{transform_indices = @transform_0, window_bounds = array<i64: 1, 8, 9, 16>}, {transform_indices = @transform_1, window_bounds = array<i64: 1, 1, 9, 16>}, {pipeline_mode = #tpu.pipeline_mode<synchronous>, transform_indices = @transform_2, window_bounds = array<i64: 4, 16, 8>}, {pipeline_mode = #tpu.pipeline_mode<synchronous>, transform_indices = @transform_3, window_bounds = array<i64: 1, 8>}, {transform_indices = @transform_4, window_bounds = array<i64: 1, 64, 8>}]} {
    %c0 = arith.constant 0 : index
    %c0_0 = arith.constant 0 : index
    %c0_1 = arith.constant 0 : index
    %c0_2 = arith.constant 0 : index
    %0 = vector.load %arg2[%c0, %c0_0, %c0_1, %c0_2] : memref<1x8x9x16xf32, #tpu.memory_space<vmem>>, vector<1x8x9x16xf32>
    %1 = vector.shape_cast %0 : vector<1x8x9x16xf32> to vector<8x9x16xf32>
    %c0_3 = arith.constant 0 : index
    %c0_4 = arith.constant 0 : index
    %c0_5 = arith.constant 0 : index
    %c0_6 = arith.constant 0 : index
    %2 = vector.load %arg3[%c0_3, %c0_4, %c0_5, %c0_6] : memref<1x1x9x16xf32, #tpu.memory_space<vmem>>, vector<1x1x9x16xf32>
    %3 = vector.shape_cast %2 : vector<1x1x9x16xf32> to vector<1x9x16xf32>
    %4 = tpu.concatenate %1, %3 in 0 : vector<8x9x16xf32>, vector<1x9x16xf32> -> vector<9x9x16xf32>
    %c0_7 = arith.constant 0 : index
    %c0_8 = arith.constant 0 : index
    %5 = vector.load %arg5[%c0_7, %c0_8] : memref<1x8xf32, #tpu.memory_space<vmem>>, vector<1x8xf32>
    %6 = vector.shape_cast %5 : vector<1x8xf32> to vector<1x8xf32>
    %7 = vector.broadcast %6 : vector<1x8xf32> to vector<64x8xf32>
    %8 = vector.extract_strided_slice %4 {offsets = [0, 0, 0], sizes = [8, 8, 16], strides = [1, 1, 1]} : vector<9x9x16xf32> to vector<8x8x16xf32>
    %9 = vector.shape_cast %8 : vector<8x8x16xf32> to vector<64x16xf32>
    %c0_9 = arith.constant 0 : index
    %c0_10 = arith.constant 0 : index
    %c0_11 = arith.constant 0 : index
    %10 = vector.load %arg4[%c0_9, %c0_10, %c0_11] : memref<4x16x8xf32, #tpu.memory_space<vmem>>, vector<1x16x8xf32>
    %11 = vector.shape_cast %10 : vector<1x16x8xf32> to vector<16x8xf32>
    %cst = arith.constant dense<0.000000e+00> : vector<64x8xf32>
    %12 = tpu.matmul %9, %11, %cst {dimension_numbers = #tpu.dot_dimension_numbers<[1], [0], [0], [1], [0, 0, 1, 1], [], []>} : vector<64x16xf32>, vector<16x8xf32>, vector<64x8xf32> -> vector<64x8xf32>
    %13 = arith.addf %7, %12 : vector<64x8xf32>
    %14 = vector.extract_strided_slice %4 {offsets = [0, 1, 0], sizes = [8, 8, 16], strides = [1, 1, 1]} : vector<9x9x16xf32> to vector<8x8x16xf32>
    %15 = vector.shape_cast %14 : vector<8x8x16xf32> to vector<64x16xf32>
    %c1 = arith.constant 1 : index
    %c0_12 = arith.constant 0 : index
    %c0_13 = arith.constant 0 : index
    %16 = vector.load %arg4[%c1, %c0_12, %c0_13] : memref<4x16x8xf32, #tpu.memory_space<vmem>>, vector<1x16x8xf32>
    %17 = vector.shape_cast %16 : vector<1x16x8xf32> to vector<16x8xf32>
    %cst_14 = arith.constant dense<0.000000e+00> : vector<64x8xf32>
    %18 = tpu.matmul %15, %17, %cst_14 {dimension_numbers = #tpu.dot_dimension_numbers<[1], [0], [0], [1], [0, 0, 1, 1], [], []>} : vector<64x16xf32>, vector<16x8xf32>, vector<64x8xf32> -> vector<64x8xf32>
    %19 = arith.addf %13, %18 : vector<64x8xf32>
    %20 = vector.extract_strided_slice %4 {offsets = [1, 0, 0], sizes = [8, 8, 16], strides = [1, 1, 1]} : vector<9x9x16xf32> to vector<8x8x16xf32>
    %21 = vector.shape_cast %20 : vector<8x8x16xf32> to vector<64x16xf32>
    %c2 = arith.constant 2 : index
    %c0_15 = arith.constant 0 : index
    %c0_16 = arith.constant 0 : index
    %22 = vector.load %arg4[%c2, %c0_15, %c0_16] : memref<4x16x8xf32, #tpu.memory_space<vmem>>, vector<1x16x8xf32>
    %23 = vector.shape_cast %22 : vector<1x16x8xf32> to vector<16x8xf32>
    %cst_17 = arith.constant dense<0.000000e+00> : vector<64x8xf32>
    %24 = tpu.matmul %21, %23, %cst_17 {dimension_numbers = #tpu.dot_dimension_numbers<[1], [0], [0], [1], [0, 0, 1, 1], [], []>} : vector<64x16xf32>, vector<16x8xf32>, vector<64x8xf32> -> vector<64x8xf32>
    %25 = arith.addf %19, %24 : vector<64x8xf32>
    %26 = vector.extract_strided_slice %4 {offsets = [1, 1, 0], sizes = [8, 8, 16], strides = [1, 1, 1]} : vector<9x9x16xf32> to vector<8x8x16xf32>
    %27 = vector.shape_cast %26 : vector<8x8x16xf32> to vector<64x16xf32>
    %c3 = arith.constant 3 : index
    %c0_18 = arith.constant 0 : index
    %c0_19 = arith.constant 0 : index
    %28 = vector.load %arg4[%c3, %c0_18, %c0_19] : memref<4x16x8xf32, #tpu.memory_space<vmem>>, vector<1x16x8xf32>
    %29 = vector.shape_cast %28 : vector<1x16x8xf32> to vector<16x8xf32>
    %cst_20 = arith.constant dense<0.000000e+00> : vector<64x8xf32>
    %30 = tpu.matmul %27, %29, %cst_20 {dimension_numbers = #tpu.dot_dimension_numbers<[1], [0], [0], [1], [0, 0, 1, 1], [], []>} : vector<64x16xf32>, vector<16x8xf32>, vector<64x8xf32> -> vector<64x8xf32>
    %31 = arith.addf %25, %30 : vector<64x8xf32>
    %c0_21 = arith.constant 0 : index
    %c0_22 = arith.constant 0 : index
    %c0_23 = arith.constant 0 : index
    %32 = vector.load %arg6[%c0_21, %c0_22, %c0_23] : memref<1x64x8xf32, #tpu.memory_space<vmem>>, vector<1x64x8xf32>
    %33 = vector.shape_cast %32 : vector<1x64x8xf32> to vector<64x8xf32>
    %34 = vector.shape_cast %31 : vector<64x8xf32> to vector<1x64x8xf32>
    tpu.vector_store %arg6[%c0_21, %c0_22, %c0_23], %34 {strides = array<i32>} : memref<1x64x8xf32, #tpu.memory_space<vmem>>, vector<1x64x8xf32>,
    return
  }
  func.func @transform_0(%arg0: i32, %arg1: i32) -> (i32, i32, i32, i32) {
    %c0_i32 = arith.constant 0 : i32
    %c0_i32_0 = arith.constant 0 : i32
    %c0_i32_1 = arith.constant 0 : i32
    return %arg0, %arg1, %c0_i32, %c0_i32_0 : i32, i32, i32, i32
  }
  func.func @transform_1(%arg0: i32, %arg1: i32) -> (i32, i32, i32, i32) {
    %c8_i32 = arith.constant 8 : i32
    %0 = arith.muli %arg1, %c8_i32 : i32
    %c8_i32_0 = arith.constant 8 : i32
    %1 = arith.addi %0, %c8_i32_0 : i32
    %c0_i32 = arith.constant 0 : i32
    %c0_i32_1 = arith.constant 0 : i32
    %c0_i32_2 = arith.constant 0 : i32
    return %arg0, %1, %c0_i32, %c0_i32_1 : i32, i32, i32, i32
  }
  func.func @transform_2(%arg0: i32, %arg1: i32) -> (i32, i32, i32) {
    %c0_i32 = arith.constant 0 : i32
    %c0_i32_0 = arith.constant 0 : i32
    %c0_i32_1 = arith.constant 0 : i32
    %c0_i32_2 = arith.constant 0 : i32
    return %c0_i32, %c0_i32_0, %c0_i32_1 : i32, i32, i32
  }
  func.func @transform_3(%arg0: i32, %arg1: i32) -> (i32, i32) {
    %c0_i32 = arith.constant 0 : i32
    %c0_i32_0 = arith.constant 0 : i32
    %c0_i32_1 = arith.constant 0 : i32
    return %c0_i32, %c0_i32_0 : i32, i32
  }
  func.func @transform_4(%arg0: i32, %arg1: i32) -> (i32, i32, i32) {
    %c0_i32 = arith.constant 0 : i32
    %c0_i32_0 = arith.constant 0 : i32
    return %arg0, %arg1, %c0_i32 : i32, i32, i32
  }
}

</mosaic_0001>

<llo_original>
// kernel: downsample_forward.1
$region0: #{downsample_forward.1}
  #allocation0 [shape = 'u32[]', space=smem, size = 0x4, offset = 0x4, fixed_abs, tag = 'smem constant byte address 0x4 - core index']
  #allocation1 [shape = 'u32[144,128]{1,0:T(1,128)}', space=vmem, size = 0x12000, scoped, tag = 'internal scratch']
  %s0 = inlined_call_operand.vmem [shape: f32[2,9,9,16], index: 0, kind: input, shape index: {}, may-alias: {0,1}]
  %s1 = inlined_call_operand.vmem [shape: f32[2,9,9,16], index: 1, kind: input, shape index: {}, may-alias: {0,1}]
  %s2 = inlined_call_operand.vmem [shape: f32[4,16,8], index: 2, kind: input, shape index: {}]
  %s3 = inlined_call_operand.vmem [shape: f32[1,8], index: 3, kind: input, shape index: {}]
  %s4 = inlined_call_operand.vmem [shape: f32[2,64,8], index: 4, kind: output, shape index: {}]
  %s5 = sld [smem:[#allocation0]]
  $region49: #{downsample_forward.1} parent=0
    _
  %s7 = ssub.s32 1, %s5
  %s8 = scalar_select 0, %s7, %s5
  loop: start=0, step=1, limit=4
  $region2: #{downsample_forward.1} parent=0 // loop_pre_header
    _
  $region3: #{downsample_forward.1} parent=0 // loop_header
    %s10 = sphi 0, %s14
    %p11 = scmp.ge.s32.totalorder %s10, 4
    %s17 = sphi 0, %s29
    %s18 = sphi 0, %s25
    %s19 = sphi 0, %s17
    %s20 = sphi 0, %s18
    %s21 = sphi 0, %s19
    %s22 = sphi 0, %s20
    %s34 = sphi 0, %s36
    %s37 = sphi 0, %s34
    %s38 = sphi 0, %s37
    %s54 = sphi 0, %s38
    %s66 = sphi 0, %s68
    %s69 = sphi 0, %s66
    %s70 = sphi 0, %s69
    %s86 = sphi 0, %s70
    %s90 = sphi 0, %s90
    %s92 = sphi 0, %s90
    %s93 = sphi 0, %s92
    %s107 = sphi 0, %s93
    %s111 = sphi 0, %s111
    %s113 = sphi 0, %s111
    %s114 = sphi 0, %s113
    %s128 = sphi 0, %s114
    %s136 = sphi 0, %s138
    %s139 = sphi 0, %s136
    %s140 = sphi 0, %s139
    %s156 = sphi 0, %s140
  $region4: #{downsample_forward.1} parent=0 // loop_header_branch
    %13 = sbr.rel (%p11) target = $region8
  $region5: #{downsample_forward.1} parent=0 // loop_body
    %s15 = ssub.s32 %s10, 1
    %s16 = ssub.s32 %s10, 2
    %s23 = sadd.s32 1, %s18
    %p24 = scmp.ge.s32.totalorder %s23, 1
    %s25 = scalar_select %p24, 0, %s23
    %s26 = sadd.s32 1, %s17
    %s27 = scalar_select %p24, %s26, %s17
    %p28 = scmp.ge.s32.totalorder %s27, 2
    %s29 = scalar_select %p28, 0, %s27
    %s30 = ssub.s32 %s17, %s29
    %s31 = ssub.s32 %s18, %s25
    %s32 = sor.u32 %s30, %s31
    %p33 = scmp.eq.s32.totalorder %s32, 0
    %s35 = sadd.s32 %s34, 1
    %s36 = scalar_select %p33, %s34, %s35
    %p39 = pneg %p33
    %p40 = scmp.eq.s32.totalorder %s10, 1
    %p41 = por %p39, %p40
    %p42 = scmp.ne.s32.totalorder %s34, %s37
    %p43 = scmp.eq.s32.totalorder %s10, 0
    %p44 = por %p42, %p43
    %p45 = scmp.ne.s32.totalorder %s34, %s37
    %p46 = scmp.eq.s32.totalorder %s15, 1
    %p47 = por %p45, %p46
    %p48 = scmp.ne.s32.totalorder %s37, %s38
    %p49 = scmp.eq.s32.totalorder %s15, 0
    %p50 = por %p48, %p49
    %p51 = scmp.ne.s32.totalorder %s37, %s38
    %p52 = scmp.eq.s32.totalorder %s16, 1
    %p53 = por %p51, %p52
    %p55 = scmp.ne.s32.totalorder %s38, %s54
    %p56 = scmp.eq.s32.totalorder %s16, 0
    %p57 = por %p55, %p56
    %s58 = smul.u32 %s18, 8
    %s59 = sadd.s32 %s58, 8
    %s60 = smul.u32 %s25, 8
    %s61 = sadd.s32 %s60, 8
    %s62 = ssub.s32 %s17, %s29
    %s63 = ssub.s32 %s59, %s61
    %s64 = sor.u32 %s62, %s63
    %p65 = scmp.eq.s32.totalorder %s64, 0
    %s67 = sadd.s32 %s66, 1
    %s68 = scalar_select %p65, %s66, %s67
    %p71 = pneg %p65
    %p72 = scmp.eq.s32.totalorder %s10, 1
    %p73 = por %p71, %p72
    %p74 = scmp.ne.s32.totalorder %s66, %s69
    %p75 = scmp.eq.s32.totalorder %s10, 0
    %p76 = por %p74, %p75
    %p77 = scmp.ne.s32.totalorder %s66, %s69
    %p78 = scmp.eq.s32.totalorder %s15, 1
    %p79 = por %p77, %p78
    %p80 = scmp.ne.s32.totalorder %s69, %s70
    %p81 = scmp.eq.s32.totalorder %s15, 0
    %p82 = por %p80, %p81
    %p83 = scmp.ne.s32.totalorder %s69, %s70
    %p84 = scmp.eq.s32.totalorder %s16, 1
    %p85 = por %p83, %p84
    %p87 = scmp.ne.s32.totalorder %s70, %s86
    %p88 = scmp.eq.s32.totalorder %s16, 0
    %p89 = por %p87, %p88
    %s91 = sadd.s32 %s90, 1
    %p94 = scmp.eq.s32.totalorder %s10, 1
    %p95 = scmp.ne.s32.totalorder %s90, %s92
    %p96 = scmp.eq.s32.totalorder %s10, 0
    %p97 = por %p95, %p96
    %p98 = scmp.ne.s32.totalorder %s90, %s92
    %p99 = scmp.eq.s32.totalorder %s15, 1
    %p100 = por %p98, %p99
    %p101 = scmp.ne.s32.totalorder %s92, %s93
    %p102 = scmp.eq.s32.totalorder %s15, 0
    %p103 = por %p101, %p102
    %p104 = scmp.ne.s32.totalorder %s92, %s93
    %p105 = scmp.eq.s32.totalorder %s16, 1
    %p106 = por %p104, %p105
    %p108 = scmp.ne.s32.totalorder %s93, %s107
    %p109 = scmp.eq.s32.totalorder %s16, 0
    %p110 = por %p108, %p109
    %s112 = sadd.s32 %s111, 1
    %p115 = scmp.eq.s32.totalorder %s10, 1
    %p116 = scmp.ne.s32.totalorder %s111, %s113
    %p117 = scmp.eq.s32.totalorder %s10, 0
    %p118 = por %p116, %p117
    %p119 = scmp.ne.s32.totalorder %s111, %s113
    %p120 = scmp.eq.s32.totalorder %s15, 1
    %p121 = por %p119, %p120
    %p122 = scmp.ne.s32.totalorder %s113, %s114
    %p123 = scmp.eq.s32.totalorder %s15, 0
    %p124 = por %p122, %p123
    %p125 = scmp.ne.s32.totalorder %s113, %s114
    %p126 = scmp.eq.s32.totalorder %s16, 1
    %p127 = por %p125, %p126
    %p129 = scmp.ne.s32.totalorder %s114, %s128
    %p130 = scmp.eq.s32.totalorder %s16, 0
    %p131 = por %p129, %p130
    %s132 = ssub.s32 %s17, %s29
    %s133 = ssub.s32 %s18, %s25
    %s134 = sor.u32 %s132, %s133
    %p135 = scmp.eq.s32.totalorder %s134, 0
    %s137 = sadd.s32 %s136, 1
    %s138 = scalar_select %p135, %s136, %s137
    %p141 = pneg %p135
    %p142 = scmp.eq.s32.totalorder %s10, 1
    %p143 = por %p141, %p142
    %p144 = scmp.ne.s32.totalorder %s136, %s139
    %p145 = scmp.eq.s32.totalorder %s10, 0
    %p146 = por %p144, %p145
    %p147 = scmp.ne.s32.totalorder %s136, %s139
    %p148 = scmp.eq.s32.totalorder %s15, 1
    %p149 = por %p147, %p148
    %p150 = scmp.ne.s32.totalorder %s139, %s140
    %p151 = scmp.eq.s32.totalorder %s15, 0
    %p152 = por %p150, %p151
    %p153 = scmp.ne.s32.totalorder %s139, %s140
    %p154 = scmp.eq.s32.totalorder %s16, 1
    %p155 = por %p153, %p154
    %p157 = scmp.ne.s32.totalorder %s140, %s156
    %p158 = scmp.eq.s32.totalorder %s16, 0
    %p159 = por %p157, %p158
    %p160 = scmp.le.s32.totalorder 1, %s10
    %p161 = scmp.lt.s32.totalorder %s10, 3
    %p162 = pnand %p160, %p161
    %p163 = pneg %p162
    // Predicated region
    $region9: #{downsample_forward.1} parent=5 // pred_check
      _
    $region10: #{downsample_forward.1} parent=5 // pred_check_branch
      %165 = sbr.rel (%p162) target = $region12
    $region11: #{downsample_forward.1} parent=5 // pred_region
      %s166 = ssub.s32 %s10, 1
      // Predicated region
      $region13: #{downsample_forward.1} parent=11 // pred_check
        %p167 = pneg %p103
      $region14: #{downsample_forward.1} parent=11 // pred_check_branch
        %169 = sbr.rel (%p167) target = $region16
      $region15: #{downsample_forward.1} parent=11 // pred_region
        _
      $region16: #{downsample_forward.1} parent=11 // pred_fallthru
        _
      // Predicated region
      $region17: #{downsample_forward.1} parent=11 // pred_check
        %p170 = pneg %p124
      $region18: #{downsample_forward.1} parent=11 // pred_check_branch
        %172 = sbr.rel (%p170) target = $region20
      $region19: #{downsample_forward.1} parent=11 // pred_region
        _
      $region20: #{downsample_forward.1} parent=11 // pred_fallthru
        _
    $region12: #{downsample_forward.1} parent=5 // pred_fallthru
      _
    %p173 = scmp.lt.s32.totalorder %s10, 2
    // Predicated region
    $region21: #{downsample_forward.1} parent=5 // pred_check
      %p174 = pneg %p173
    $region22: #{downsample_forward.1} parent=5 // pred_check_branch
      %176 = sbr.rel (%p174) target = $region24
    $region23: #{downsample_forward.1} parent=5 // pred_region
      // Predicated region
      $region25: #{downsample_forward.1} parent=23 // pred_check
        %p177 = pneg %p44
      $region26: #{downsample_forward.1} parent=23 // pred_check_branch
        %179 = sbr.rel (%p177) target = $region28
      $region27: #{downsample_forward.1} parent=23 // pred_region
        %s180 = smul.u32 8, %s18
        %s181 = ssub.s32 9, %s180
        %p182 = scmp.lt.s32.totalorder %s181, 8
        %s183 = scalar_select %p182, %s181, 8
        %s184 = smul.u32 128, %s183
        %s185 = smul.u32 %s184, 2
        %p186 = scmp.lt.s32.totalorder %s17, 1
        %s187 = scalar_select %p186, %s17, 1
        %p188 = scmp.lt.s32.totalorder %s180, 8
        %s189 = scalar_select %p188, %s180, 8
        %s190 = smul.addr %s189, 2
        %s191 = smul.addr %s187, 18
        %s192 = sadd.s32 %s190, %s191
        %s193 = smul.addr %s192, 8
        %s194 = scalar_lea.vmem %s0, %s193
        %s195 = smul.u32 8, %s18
        %s196 = ssub.s32 9, %s195
        %p197 = scmp.lt.s32.totalorder %s196, 8
        %s198 = scalar_select %p197, %s196, 8
        %s199 = smul.u32 128, %s198
        %s200 = smul.u32 %s199, 2
      $region28: #{downsample_forward.1} parent=23 // pred_fallthru
        _
      // Predicated region
      $region29: #{downsample_forward.1} parent=23 // pred_check
        %p201 = pneg %p76
      $region30: #{downsample_forward.1} parent=23 // pred_check_branch
        %203 = sbr.rel (%p201) target = $region32
      $region31: #{downsample_forward.1} parent=23 // pred_region
        %s204 = smul.u32 %s18, 8
        %s205 = sadd.s32 %s204, 8
        %p206 = scmp.lt.s32.totalorder %s17, 1
        %s207 = scalar_select %p206, %s17, 1
        %p208 = scmp.lt.s32.totalorder %s205, 8
        %s209 = scalar_select %p208, %s205, 8
        %s210 = smul.addr %s209, 2
        %s211 = smul.addr %s207, 18
        %s212 = sadd.s32 %s210, %s211
        %s213 = smul.addr %s212, 8
        %s214 = scalar_lea.vmem %s1, %s213
        %s215 = smul.u32 %s18, 8
        %s216 = sadd.s32 %s215, 8
      $region32: #{downsample_forward.1} parent=23 // pred_fallthru
        _
    $region24: #{downsample_forward.1} parent=5 // pred_fallthru
      _
    %p217 = scmp.le.s32.totalorder 1, %s10
    %p218 = scmp.lt.s32.totalorder %s10, 3
    %p219 = pnand %p217, %p218
    %p220 = pneg %p219
    // Predicated region
    $region33: #{downsample_forward.1} parent=5 // pred_check
      _
    $region34: #{downsample_forward.1} parent=5 // pred_check_branch
      %222 = sbr.rel (%p219) target = $region36
    $region35: #{downsample_forward.1} parent=5 // pred_region
      %s223 = ssub.s32 %s10, 1
      %s224 = smul.u32 8, %s20
      %s225 = ssub.s32 9, %s224
      %p226 = scmp.lt.s32.totalorder %s225, 8
      %s227 = scalar_select %p226, %s225, 8
      %s228 = smul.u32 128, %s227
      %s229 = smul.u32 %s228, 2
      %p230 = scmp.lt.s32.totalorder %s19, 1
      %s231 = scalar_select %p230, %s19, 1
      %p232 = scmp.lt.s32.totalorder %s224, 8
      %s233 = scalar_select %p232, %s224, 8
      %s234 = smul.addr %s233, 2
      %s235 = smul.addr %s231, 18
      %s236 = sadd.s32 %s234, %s235
      %s237 = smul.addr %s236, 8
      %s238 = scalar_lea.vmem %s0, %s237
      %p239 = pneg %p50
      %p240 = pneg %p47
      %s241 = smul.u32 %s20, 8
      %s242 = sadd.s32 %s241, 8
      %p243 = scmp.lt.s32.totalorder %s19, 1
      %s244 = scalar_select %p243, %s19, 1
      %p245 = scmp.lt.s32.totalorder %s242, 8
      %s246 = scalar_select %p245, %s242, 8
      %s247 = smul.addr %s246, 2
      %s248 = smul.addr %s244, 18
      %s249 = sadd.s32 %s247, %s248
      %s250 = smul.addr %s249, 8
      %s251 = scalar_lea.vmem %s1, %s250
      %p252 = pneg %p82
      %p253 = pneg %p79
      %p254 = pneg %p103
      %p255 = pneg %p100
      %p256 = pneg %p124
      %p257 = pneg %p121
      %p258 = pneg %p152
      %p259 = pneg %p149
      %s260 = smul.u32 8, %s20
      %p261 = scmp.lt.s32.totalorder %s19, 1
      %s262 = scalar_select %p261, %s19, 1
      %p263 = scmp.lt.s32.totalorder %s260, 7
      %s264 = scalar_select %p263, %s260, 7
      %s265 = smul.addr %s262, 8
      %s266 = sadd.s32 %s264, %s265
      %s267 = smul.addr %s266, 8
      %s268 = scalar_lea.vmem %s4, %s267
      %s269 = smul.u32 8, %s20
      %s270 = ssub.s32 9, %s269
      %p271 = scmp.lt.s32.totalorder %s270, 8
      %s272 = scalar_select %p271, %s270, 8
      %s273 = smul.u32 128, %s272
      %s274 = smul.u32 %s273, 2
      %p275 = scmp.lt.s32.totalorder %s19, 1
      %s276 = scalar_select %p275, %s19, 1
      %p277 = scmp.lt.s32.totalorder %s269, 8
      %s278 = scalar_select %p277, %s269, 8
      %s279 = smul.addr %s278, 2
      %s280 = smul.addr %s276, 18
      %s281 = sadd.s32 %s279, %s280
      %s282 = smul.addr %s281, 8
      %s283 = scalar_lea.vmem %s0, %s282
      %s284 = smul.u32 8, %s20
      %s285 = ssub.s32 9, %s284
      %p286 = scmp.lt.s32.totalorder %s285, 8
      %s287 = scalar_select %p286, %s285, 8
      %s288 = smul.u32 128, %s287
      %s289 = smul.u32 %s288, 2
      %s290 = smul.u32 %s20, 8
      %s291 = sadd.s32 %s290, 8
      %p292 = scmp.lt.s32.totalorder %s19, 1
      %s293 = scalar_select %p292, %s19, 1
      %p294 = scmp.lt.s32.totalorder %s291, 8
      %s295 = scalar_select %p294, %s291, 8
      %s296 = smul.addr %s295, 2
      %s297 = smul.addr %s293, 18
      %s298 = sadd.s32 %s296, %s297
      %s299 = smul.addr %s298, 8
      %s300 = scalar_lea.vmem %s1, %s299
      %s301 = smul.u32 %s20, 8
      %s302 = sadd.s32 %s301, 8
      %s303 = smul.u32 8, %s20
      %p304 = scmp.lt.s32.totalorder %s19, 1
      %s305 = scalar_select %p304, %s19, 1
      %p306 = scmp.lt.s32.totalorder %s303, 7
      %s307 = scalar_select %p306, %s303, 7
      %s308 = smul.addr %s305, 8
      %s309 = sadd.s32 %s307, %s308
      %s310 = smul.addr %s309, 8
      %s311 = scalar_lea.vmem %s4, %s310
      %s312 = smul.u32 8, %s20
      %v313 = vld [vmem:[%s283] sm:$0xff]
      %v314 = vld [vmem:[%s283 + $0x8] sm:$0x1]
      %v315 = vld [vmem:[%s283 + $0x10] sm:$0xff]
      %v316 = vld [vmem:[%s283 + $0x18] sm:$0x1]
      %v317 = vld [vmem:[%s283 + $0x20] sm:$0xff]
      %v318 = vld [vmem:[%s283 + $0x28] sm:$0x1]
      %v319 = vld [vmem:[%s283 + $0x30] sm:$0xff]
      %v320 = vld [vmem:[%s283 + $0x38] sm:$0x1]
      %v321 = vld [vmem:[%s283 + $0x40] sm:$0xff]
      %v322 = vld [vmem:[%s283 + $0x48] sm:$0x1]
      %v323 = vld [vmem:[%s283 + $0x50] sm:$0xff]
      %v324 = vld [vmem:[%s283 + $0x58] sm:$0x1]
      %v325 = vld [vmem:[%s283 + $0x60] sm:$0xff]
      %v326 = vld [vmem:[%s283 + $0x68] sm:$0x1]
      %v327 = vld [vmem:[%s283 + $0x70] sm:$0xff]
      %v328 = vld [vmem:[%s283 + $0x78] sm:$0x1]
      %v329 = vld [vmem:[%s300] sm:$0xff]
      %v330 = vld [vmem:[%s300 + $0x8] sm:$0x1]
      %v331 = vld [vmem:[%s3] sm:$0x1]
      %v333 = vlaneseq
      %v334 = vshrl.u32 %v333, 7
      %v335 = vsub.s32 0, %v334
      %v336 = vrot.slane %v331, %v335
      %v338 = vld [vmem:[%s2] sm:$0xff]
      %v339 = vld [vmem:[%s2 + $0x8] sm:$0xff]
      %vm340 = vcmask 130048
      %v342 = vsel %vm340, %v313, 0
      %v345 = vsel %vm340, %v315, 0
      %v348 = vsel %vm340, %v317, 0
      %v351 = vsel %vm340, %v319, 0
      %v354 = vsel %vm340, %v321, 0
      %v357 = vsel %vm340, %v323, 0
      %v360 = vsel %vm340, %v325, 0
      %v363 = vsel %vm340, %v327, 0
      %365 = vmatprep.subr.mxu0 0.0
      %366 = vmatpush1.msra.mxu0 0.0
      %367 = vmatprep.subr.mxu0 0.0
      %368 = vmatpush1.msra.mxu0 0.0
      %369 = vmatprep.subr.mxu0 0.0
      %370 = vmatpush1.msra.mxu0 0.0
      %371 = vmatprep.subr.mxu0 0.0
      %372 = vmatpush1.msra.mxu0 0.0
      %373 = vmatprep.subr.mxu0 0.0
      %374 = vmatpush1.msra.mxu0 0.0
      %375 = vmatprep.subr.mxu0 0.0
      %376 = vmatpush1.msra.mxu0 0.0
      %377 = vmatprep.subr.mxu0 0.0
      %378 = vmatpush1.msra.mxu0 0.0
      %379 = vmatprep.subr.mxu0 0.0
      %380 = vmatpush1.msra.mxu0 0.0
      %381 = vmatprep.subr.mxu0 0.0
      %382 = vmatpush1.msra.mxu0 0.0
      %383 = vmatprep.subr.mxu0 0.0
      %384 = vmatpush1.msra.mxu0 0.0
      %385 = vmatprep.subr.mxu0 0.0
      %386 = vmatpush1.msra.mxu0 0.0
      %387 = vmatprep.subr.mxu0 0.0
      %388 = vmatpush1.msra.mxu0 0.0
      %389 = vmatprep.subr.mxu0 0.0
      %390 = vmatpush1.msra.mxu0 0.0
      %391 = vmatprep.subr.mxu0 0.0
      %392 = vmatpush1.msra.mxu0 0.0
      %393 = vmatprep.subr.mxu0 0.0
      %394 = vmatpush1.msra.mxu0 %v339
      %395 = vmatprep.subr.mxu0 0.0
      %396 = vmatpush1.msra.mxu0 %v338
      %397 = vmatprep.subr.mxu0 0.0
      %398 = vmatpush2.msra.mxu0 0.0
      %399 = vmatprep.subr.mxu0 0.0
      %400 = vmatpush2.msra.mxu0 0.0
      %401 = vmatprep.subr.mxu0 0.0
      %402 = vmatpush2.msra.mxu0 0.0
      %403 = vmatprep.subr.mxu0 0.0
      %404 = vmatpush2.msra.mxu0 0.0
      %405 = vmatprep.subr.mxu0 0.0
      %406 = vmatpush2.msra.mxu0 0.0
      %407 = vmatprep.subr.mxu0 0.0
      %408 = vmatpush2.msra.mxu0 0.0
      %409 = vmatprep.subr.mxu0 0.0
      %410 = vmatpush2.msra.mxu0 0.0
      %411 = vmatprep.subr.mxu0 0.0
      %412 = vmatpush2.msra.mxu0 0.0
      %413 = vmatprep.subr.mxu0 0.0
      %414 = vmatpush2.msra.mxu0 0.0
      %415 = vmatprep.subr.mxu0 0.0
      %416 = vmatpush2.msra.mxu0 0.0
      %417 = vmatprep.subr.mxu0 0.0
      %418 = vmatpush2.msra.mxu0 0.0
      %419 = vmatprep.subr.mxu0 0.0
      %420 = vmatpush2.msra.mxu0 0.0
      %421 = vmatprep.subr.mxu0 0.0
      %422 = vmatpush2.msra.mxu0 0.0
      %423 = vmatprep.subr.mxu0 0.0
      %424 = vmatpush2.msra.mxu0 0.0
      %425 = vmatprep.subr.mxu0 0.0
      %426 = vmatpush2.msra.mxu0 0.0
      %427 = vmatprep.subr.mxu0 0.0
      %428 = vmatpush2.msra.mxu0 0.0
      %429 = vmatprep.mubr.f32.mxu0 0.0
      %430 = vmatmul.mubr.f32.gmra.mxu0 %v342
      %v431 = vpop.f32.mrf.mxu0
      %v432 = vadd.f32 0.0, %v431
      %v433 = vpop.f32.mrf.mxu0
      %434 = vmatprep.mubr.f32.mxu0 0.0
      %435 = vmatmul.mubr.f32.gmra.mxu0 %v345
      %v436 = vpop.f32.mrf.mxu0
      %v437 = vadd.f32 0.0, %v436
      %v438 = vpop.f32.mrf.mxu0
      %439 = vmatprep.mubr.f32.mxu0 0.0
      %440 = vmatmul.mubr.f32.gmra.mxu0 %v348
      %v441 = vpop.f32.mrf.mxu0
      %v442 = vadd.f32 0.0, %v441
      %v443 = vpop.f32.mrf.mxu0
      %444 = vmatprep.mubr.f32.mxu0 0.0
      %445 = vmatmul.mubr.f32.gmra.mxu0 %v351
      %v446 = vpop.f32.mrf.mxu0
      %v447 = vadd.f32 0.0, %v446
      %v448 = vpop.f32.mrf.mxu0
      %449 = vmatprep.mubr.f32.mxu0 0.0
      %450 = vmatmul.mubr.f32.gmra.mxu0 %v354
      %v451 = vpop.f32.mrf.mxu0
      %v452 = vadd.f32 0.0, %v451
      %v453 = vpop.f32.mrf.mxu0
      %454 = vmatprep.mubr.f32.mxu0 0.0
      %455 = vmatmul.mubr.f32.gmra.mxu0 %v357
      %v456 = vpop.f32.mrf.mxu0
      %v457 = vadd.f32 0.0, %v456
      %v458 = vpop.f32.mrf.mxu0
      %459 = vmatprep.mubr.f32.mxu0 0.0
      %460 = vmatmul.mubr.f32.gmra.mxu0 %v360
      %v461 = vpop.f32.mrf.mxu0
      %v462 = vadd.f32 0.0, %v461
      %v463 = vpop.f32.mrf.mxu0
      %464 = vmatprep.mubr.f32.mxu0 0.0
      %465 = vmatmul.mubr.f32.gmra.mxu0 %v363
      %v466 = vpop.f32.mrf.mxu0
      %v467 = vadd.f32 0.0, %v466
      %v468 = vpop.f32.mrf.mxu0
      %469 = vdwg.mxu0
      %v470 = vadd.f32 %v336, %v432
      %v471 = vadd.f32 %v336, %v437
      %v472 = vadd.f32 %v336, %v442
      %v473 = vadd.f32 %v336, %v447
      %v474 = vadd.f32 %v336, %v452
      %v475 = vadd.f32 %v336, %v457
      %v476 = vadd.f32 %v336, %v462
      %v477 = vadd.f32 %v336, %v467
      %vm486 = vcmask 1046528
      %v487 = vrot.slane %v313, 1
      %v488 = vrot.slane %v314, 1
      %v489 = vsel %vm486, %v487, %v488
      %v490 = vrot.slane %v315, 1
      %v491 = vrot.slane %v316, 1
      %v492 = vsel %vm486, %v490, %v491
      %v493 = vrot.slane %v317, 1
      %v494 = vrot.slane %v318, 1
      %v495 = vsel %vm486, %v493, %v494
      %v496 = vrot.slane %v319, 1
      %v497 = vrot.slane %v320, 1
      %v498 = vsel %vm486, %v496, %v497
      %v499 = vrot.slane %v321, 1
      %v500 = vrot.slane %v322, 1
      %v501 = vsel %vm486, %v499, %v500
      %v502 = vrot.slane %v323, 1
      %v503 = vrot.slane %v324, 1
      %v504 = vsel %vm486, %v502, %v503
      %v505 = vrot.slane %v325, 1
      %v506 = vrot.slane %v326, 1
      %v507 = vsel %vm486, %v505, %v506
      %v508 = vrot.slane %v327, 1
      %v509 = vrot.slane %v328, 1
      %v510 = vsel %vm486, %v508, %v509
      %s511 = scalar_lea.vmem %s2, 16
      %v512 = vld [vmem:[%s511] sm:$0xff]
      %v513 = vld [vmem:[%s511 + $0x8] sm:$0xff]
      %v514 = vsel %vm340, %v489, 0
      %v516 = vsel %vm340, %v492, 0
      %v518 = vsel %vm340, %v495, 0
      %v520 = vsel %vm340, %v498, 0
      %v522 = vsel %vm340, %v501, 0
      %v524 = vsel %vm340, %v504, 0
      %v526 = vsel %vm340, %v507, 0
      %v528 = vsel %vm340, %v510, 0
      %530 = vmatprep.subr.mxu0 0.0
      %531 = vmatpush1.msra.mxu0 0.0
      %532 = vmatprep.subr.mxu0 0.0
      %533 = vmatpush1.msra.mxu0 0.0
      %534 = vmatprep.subr.mxu0 0.0
      %535 = vmatpush1.msra.mxu0 0.0
      %536 = vmatprep.subr.mxu0 0.0
      %537 = vmatpush1.msra.mxu0 0.0
      %538 = vmatprep.subr.mxu0 0.0
      %539 = vmatpush1.msra.mxu0 0.0
      %540 = vmatprep.subr.mxu0 0.0
      %541 = vmatpush1.msra.mxu0 0.0
      %542 = vmatprep.subr.mxu0 0.0
      %543 = vmatpush1.msra.mxu0 0.0
      %544 = vmatprep.subr.mxu0 0.0
      %545 = vmatpush1.msra.mxu0 0.0
      %546 = vmatprep.subr.mxu0 0.0
      %547 = vmatpush1.msra.mxu0 0.0
      %548 = vmatprep.subr.mxu0 0.0
      %549 = vmatpush1.msra.mxu0 0.0
      %550 = vmatprep.subr.mxu0 0.0
      %551 = vmatpush1.msra.mxu0 0.0
      %552 = vmatprep.subr.mxu0 0.0
      %553 = vmatpush1.msra.mxu0 0.0
      %554 = vmatprep.subr.mxu0 0.0
      %555 = vmatpush1.msra.mxu0 0.0
      %556 = vmatprep.subr.mxu0 0.0
      %557 = vmatpush1.msra.mxu0 0.0
      %558 = vmatprep.subr.mxu0 0.0
      %559 = vmatpush1.msra.mxu0 %v513
      %560 = vmatprep.subr.mxu0 0.0
      %561 = vmatpush1.msra.mxu0 %v512
      %562 = vmatprep.subr.mxu0 0.0
      %563 = vmatpush2.msra.mxu0 0.0
      %564 = vmatprep.subr.mxu0 0.0
      %565 = vmatpush2.msra.mxu0 0.0
      %566 = vmatprep.subr.mxu0 0.0
      %567 = vmatpush2.msra.mxu0 0.0
      %568 = vmatprep.subr.mxu0 0.0
      %569 = vmatpush2.msra.mxu0 0.0
      %570 = vmatprep.subr.mxu0 0.0
      %571 = vmatpush2.msra.mxu0 0.0
      %572 = vmatprep.subr.mxu0 0.0
      %573 = vmatpush2.msra.mxu0 0.0
      %574 = vmatprep.subr.mxu0 0.0
      %575 = vmatpush2.msra.mxu0 0.0
      %576 = vmatprep.subr.mxu0 0.0
      %577 = vmatpush2.msra.mxu0 0.0
      %578 = vmatprep.subr.mxu0 0.0
      %579 = vmatpush2.msra.mxu0 0.0
      %580 = vmatprep.subr.mxu0 0.0
      %581 = vmatpush2.msra.mxu0 0.0
      %582 = vmatprep.subr.mxu0 0.0
      %583 = vmatpush2.msra.mxu0 0.0
      %584 = vmatprep.subr.mxu0 0.0
      %585 = vmatpush2.msra.mxu0 0.0
      %586 = vmatprep.subr.mxu0 0.0
      %587 = vmatpush2.msra.mxu0 0.0
      %588 = vmatprep.subr.mxu0 0.0
      %589 = vmatpush2.msra.mxu0 0.0
      %590 = vmatprep.subr.mxu0 0.0
      %591 = vmatpush2.msra.mxu0 0.0
      %592 = vmatprep.subr.mxu0 0.0
      %593 = vmatpush2.msra.mxu0 0.0
      %594 = vmatprep.mubr.f32.mxu0 0.0
      %595 = vmatmul.mubr.f32.gmra.mxu0 %v514
      %v596 = vpop.f32.mrf.mxu0
      %v597 = vadd.f32 0.0, %v596
      %v598 = vpop.f32.mrf.mxu0
      %599 = vmatprep.mubr.f32.mxu0 0.0
      %600 = vmatmul.mubr.f32.gmra.mxu0 %v516
      %v601 = vpop.f32.mrf.mxu0
      %v602 = vadd.f32 0.0, %v601
      %v603 = vpop.f32.mrf.mxu0
      %604 = vmatprep.mubr.f32.mxu0 0.0
      %605 = vmatmul.mubr.f32.gmra.mxu0 %v518
      %v606 = vpop.f32.mrf.mxu0
      %v607 = vadd.f32 0.0, %v606
      %v608 = vpop.f32.mrf.mxu0
      %609 = vmatprep.mubr.f32.mxu0 0.0
      %610 = vmatmul.mubr.f32.gmra.mxu0 %v520
      %v611 = vpop.f32.mrf.mxu0
      %v612 = vadd.f32 0.0, %v611
      %v613 = vpop.f32.mrf.mxu0
      %614 = vmatprep.mubr.f32.mxu0 0.0
      %615 = vmatmul.mubr.f32.gmra.mxu0 %v522
      %v616 = vpop.f32.mrf.mxu0
      %v617 = vadd.f32 0.0, %v616
      %v618 = vpop.f32.mrf.mxu0
      %619 = vmatprep.mubr.f32.mxu0 0.0
      %620 = vmatmul.mubr.f32.gmra.mxu0 %v524
      %v621 = vpop.f32.mrf.mxu0
      %v622 = vadd.f32 0.0, %v621
      %v623 = vpop.f32.mrf.mxu0
      %624 = vmatprep.mubr.f32.mxu0 0.0
      %625 = vmatmul.mubr.f32.gmra.mxu0 %v526
      %v626 = vpop.f32.mrf.mxu0
      %v627 = vadd.f32 0.0, %v626
      %v628 = vpop.f32.mrf.mxu0
      %629 = vmatprep.mubr.f32.mxu0 0.0
      %630 = vmatmul.mubr.f32.gmra.mxu0 %v528
      %v631 = vpop.f32.mrf.mxu0
      %v632 = vadd.f32 0.0, %v631
      %v633 = vpop.f32.mrf.mxu0
      %634 = vdwg.mxu0
      %v635 = vadd.f32 %v470, %v597
      %v636 = vadd.f32 %v471, %v602
      %v637 = vadd.f32 %v472, %v607
      %v638 = vadd.f32 %v473, %v612
      %v639 = vadd.f32 %v474, %v617
      %v640 = vadd.f32 %v475, %v622
      %v641 = vadd.f32 %v476, %v627
      %v642 = vadd.f32 %v477, %v632
      %s643 = scalar_lea.vmem %s2, 32
      %v644 = vld [vmem:[%s643] sm:$0xff]
      %v645 = vld [vmem:[%s643 + $0x8] sm:$0xff]
      %v647 = vsel %vm340, %v329, 0
      %649 = vmatprep.subr.mxu0 0.0
      %650 = vmatpush1.msra.mxu0 0.0
      %651 = vmatprep.subr.mxu0 0.0
      %652 = vmatpush1.msra.mxu0 0.0
      %653 = vmatprep.subr.mxu0 0.0
      %654 = vmatpush1.msra.mxu0 0.0
      %655 = vmatprep.subr.mxu0 0.0
      %656 = vmatpush1.msra.mxu0 0.0
      %657 = vmatprep.subr.mxu0 0.0
      %658 = vmatpush1.msra.mxu0 0.0
      %659 = vmatprep.subr.mxu0 0.0
      %660 = vmatpush1.msra.mxu0 0.0
      %661 = vmatprep.subr.mxu0 0.0
      %662 = vmatpush1.msra.mxu0 0.0
      %663 = vmatprep.subr.mxu0 0.0
      %664 = vmatpush1.msra.mxu0 0.0
      %665 = vmatprep.subr.mxu0 0.0
      %666 = vmatpush1.msra.mxu0 0.0
      %667 = vmatprep.subr.mxu0 0.0
      %668 = vmatpush1.msra.mxu0 0.0
      %669 = vmatprep.subr.mxu0 0.0
      %670 = vmatpush1.msra.mxu0 0.0
      %671 = vmatprep.subr.mxu0 0.0
      %672 = vmatpush1.msra.mxu0 0.0
      %673 = vmatprep.subr.mxu0 0.0
      %674 = vmatpush1.msra.mxu0 0.0
      %675 = vmatprep.subr.mxu0 0.0
      %676 = vmatpush1.msra.mxu0 0.0
      %677 = vmatprep.subr.mxu0 0.0
      %678 = vmatpush1.msra.mxu0 %v645
      %679 = vmatprep.subr.mxu0 0.0
      %680 = vmatpush1.msra.mxu0 %v644
      %681 = vmatprep.subr.mxu0 0.0
      %682 = vmatpush2.msra.mxu0 0.0
      %683 = vmatprep.subr.mxu0 0.0
      %684 = vmatpush2.msra.mxu0 0.0
      %685 = vmatprep.subr.mxu0 0.0
      %686 = vmatpush2.msra.mxu0 0.0
      %687 = vmatprep.subr.mxu0 0.0
      %688 = vmatpush2.msra.mxu0 0.0
      %689 = vmatprep.subr.mxu0 0.0
      %690 = vmatpush2.msra.mxu0 0.0
      %691 = vmatprep.subr.mxu0 0.0
      %692 = vmatpush2.msra.mxu0 0.0
      %693 = vmatprep.subr.mxu0 0.0
      %694 = vmatpush2.msra.mxu0 0.0
      %695 = vmatprep.subr.mxu0 0.0
      %696 = vmatpush2.msra.mxu0 0.0
      %697 = vmatprep.subr.mxu0 0.0
      %698 = vmatpush2.msra.mxu0 0.0
      %699 = vmatprep.subr.mxu0 0.0
      %700 = vmatpush2.msra.mxu0 0.0
      %701 = vmatprep.subr.mxu0 0.0
      %702 = vmatpush2.msra.mxu0 0.0
      %703 = vmatprep.subr.mxu0 0.0
      %704 = vmatpush2.msra.mxu0 0.0
      %705 = vmatprep.subr.mxu0 0.0
      %706 = vmatpush2.msra.mxu0 0.0
      %707 = vmatprep.subr.mxu0 0.0
      %708 = vmatpush2.msra.mxu0 0.0
      %709 = vmatprep.subr.mxu0 0.0
      %710 = vmatpush2.msra.mxu0 0.0
      %711 = vmatprep.subr.mxu0 0.0
      %712 = vmatpush2.msra.mxu0 0.0
      %713 = vmatprep.mubr.f32.mxu0 0.0
      %714 = vmatmul.mubr.f32.gmra.mxu0 %v345
      %v715 = vpop.f32.mrf.mxu0
      %v716 = vadd.f32 0.0, %v715
      %v717 = vpop.f32.mrf.mxu0
      %718 = vmatprep.mubr.f32.mxu0 0.0
      %719 = vmatmul.mubr.f32.gmra.mxu0 %v348
      %v720 = vpop.f32.mrf.mxu0
      %v721 = vadd.f32 0.0, %v720
      %v722 = vpop.f32.mrf.mxu0
      %723 = vmatprep.mubr.f32.mxu0 0.0
      %724 = vmatmul.mubr.f32.gmra.mxu0 %v351
      %v725 = vpop.f32.mrf.mxu0
      %v726 = vadd.f32 0.0, %v725
      %v727 = vpop.f32.mrf.mxu0
      %728 = vmatprep.mubr.f32.mxu0 0.0
      %729 = vmatmul.mubr.f32.gmra.mxu0 %v354
      %v730 = vpop.f32.mrf.mxu0
      %v731 = vadd.f32 0.0, %v730
      %v732 = vpop.f32.mrf.mxu0
      %733 = vmatprep.mubr.f32.mxu0 0.0
      %734 = vmatmul.mubr.f32.gmra.mxu0 %v357
      %v735 = vpop.f32.mrf.mxu0
      %v736 = vadd.f32 0.0, %v735
      %v737 = vpop.f32.mrf.mxu0
      %738 = vmatprep.mubr.f32.mxu0 0.0
      %739 = vmatmul.mubr.f32.gmra.mxu0 %v360
      %v740 = vpop.f32.mrf.mxu0
      %v741 = vadd.f32 0.0, %v740
      %v742 = vpop.f32.mrf.mxu0
      %743 = vmatprep.mubr.f32.mxu0 0.0
      %744 = vmatmul.mubr.f32.gmra.mxu0 %v363
      %v745 = vpop.f32.mrf.mxu0
      %v746 = vadd.f32 0.0, %v745
      %v747 = vpop.f32.mrf.mxu0
      %748 = vmatprep.mubr.f32.mxu0 0.0
      %749 = vmatmul.mubr.f32.gmra.mxu0 %v647
      %v750 = vpop.f32.mrf.mxu0
      %v751 = vadd.f32 0.0, %v750
      %v752 = vpop.f32.mrf.mxu0
      %753 = vdwg.mxu0
      %v754 = vadd.f32 %v635, %v716
      %v755 = vadd.f32 %v636, %v721
      %v756 = vadd.f32 %v637, %v726
      %v757 = vadd.f32 %v638, %v731
      %v758 = vadd.f32 %v639, %v736
      %v759 = vadd.f32 %v640, %v741
      %v760 = vadd.f32 %v641, %v746
      %v761 = vadd.f32 %v642, %v751
      %v763 = vrot.slane %v329, 1
      %v764 = vrot.slane %v330, 1
      %v765 = vsel %vm486, %v763, %v764
      %s766 = scalar_lea.vmem %s2, 48
      %v767 = vld [vmem:[%s766] sm:$0xff]
      %v768 = vld [vmem:[%s766 + $0x8] sm:$0xff]
      %v769 = vsel %vm340, %v765, 0
      %771 = vmatprep.subr.mxu0 0.0
      %772 = vmatpush1.msra.mxu0 0.0
      %773 = vmatprep.subr.mxu0 0.0
      %774 = vmatpush1.msra.mxu0 0.0
      %775 = vmatprep.subr.mxu0 0.0
      %776 = vmatpush1.msra.mxu0 0.0
      %777 = vmatprep.subr.mxu0 0.0
      %778 = vmatpush1.msra.mxu0 0.0
      %779 = vmatprep.subr.mxu0 0.0
      %780 = vmatpush1.msra.mxu0 0.0
      %781 = vmatprep.subr.mxu0 0.0
      %782 = vmatpush1.msra.mxu0 0.0
      %783 = vmatprep.subr.mxu0 0.0
      %784 = vmatpush1.msra.mxu0 0.0
      %785 = vmatprep.subr.mxu0 0.0
      %786 = vmatpush1.msra.mxu0 0.0
      %787 = vmatprep.subr.mxu0 0.0
      %788 = vmatpush1.msra.mxu0 0.0
      %789 = vmatprep.subr.mxu0 0.0
      %790 = vmatpush1.msra.mxu0 0.0
      %791 = vmatprep.subr.mxu0 0.0
      %792 = vmatpush1.msra.mxu0 0.0
      %793 = vmatprep.subr.mxu0 0.0
      %794 = vmatpush1.msra.mxu0 0.0
      %795 = vmatprep.subr.mxu0 0.0
      %796 = vmatpush1.msra.mxu0 0.0
      %797 = vmatprep.subr.mxu0 0.0
      %798 = vmatpush1.msra.mxu0 0.0
      %799 = vmatprep.subr.mxu0 0.0
      %800 = vmatpush1.msra.mxu0 %v768
      %801 = vmatprep.subr.mxu0 0.0
      %802 = vmatpush1.msra.mxu0 %v767
      %803 = vmatprep.subr.mxu0 0.0
      %804 = vmatpush2.msra.mxu0 0.0
      %805 = vmatprep.subr.mxu0 0.0
      %806 = vmatpush2.msra.mxu0 0.0
      %807 = vmatprep.subr.mxu0 0.0
      %808 = vmatpush2.msra.mxu0 0.0
      %809 = vmatprep.subr.mxu0 0.0
      %810 = vmatpush2.msra.mxu0 0.0
      %811 = vmatprep.subr.mxu0 0.0
      %812 = vmatpush2.msra.mxu0 0.0
      %813 = vmatprep.subr.mxu0 0.0
      %814 = vmatpush2.msra.mxu0 0.0
      %815 = vmatprep.subr.mxu0 0.0
      %816 = vmatpush2.msra.mxu0 0.0
      %817 = vmatprep.subr.mxu0 0.0
      %818 = vmatpush2.msra.mxu0 0.0
      %819 = vmatprep.subr.mxu0 0.0
      %820 = vmatpush2.msra.mxu0 0.0
      %821 = vmatprep.subr.mxu0 0.0
      %822 = vmatpush2.msra.mxu0 0.0
      %823 = vmatprep.subr.mxu0 0.0
      %824 = vmatpush2.msra.mxu0 0.0
      %825 = vmatprep.subr.mxu0 0.0
      %826 = vmatpush2.msra.mxu0 0.0
      %827 = vmatprep.subr.mxu0 0.0
      %828 = vmatpush2.msra.mxu0 0.0
      %829 = vmatprep.subr.mxu0 0.0
      %830 = vmatpush2.msra.mxu0 0.0
      %831 = vmatprep.subr.mxu0 0.0
      %832 = vmatpush2.msra.mxu0 0.0
      %833 = vmatprep.subr.mxu0 0.0
      %834 = vmatpush2.msra.mxu0 0.0
      %835 = vmatprep.mubr.f32.mxu0 0.0
      %836 = vmatmul.mubr.f32.gmra.mxu0 %v516
      %v837 = vpop.f32.mrf.mxu0
      %v838 = vadd.f32 0.0, %v837
      %v839 = vpop.f32.mrf.mxu0
      %840 = vmatprep.mubr.f32.mxu0 0.0
      %841 = vmatmul.mubr.f32.gmra.mxu0 %v518
      %v842 = vpop.f32.mrf.mxu0
      %v843 = vadd.f32 0.0, %v842
      %v844 = vpop.f32.mrf.mxu0
      %845 = vmatprep.mubr.f32.mxu0 0.0
      %846 = vmatmul.mubr.f32.gmra.mxu0 %v520
      %v847 = vpop.f32.mrf.mxu0
      %v848 = vadd.f32 0.0, %v847
      %v849 = vpop.f32.mrf.mxu0
      %850 = vmatprep.mubr.f32.mxu0 0.0
      %851 = vmatmul.mubr.f32.gmra.mxu0 %v522
      %v852 = vpop.f32.mrf.mxu0
      %v853 = vadd.f32 0.0, %v852
      %v854 = vpop.f32.mrf.mxu0
      %855 = vmatprep.mubr.f32.mxu0 0.0
      %856 = vmatmul.mubr.f32.gmra.mxu0 %v524
      %v857 = vpop.f32.mrf.mxu0
      %v858 = vadd.f32 0.0, %v857
      %v859 = vpop.f32.mrf.mxu0
      %860 = vmatprep.mubr.f32.mxu0 0.0
      %861 = vmatmul.mubr.f32.gmra.mxu0 %v526
      %v862 = vpop.f32.mrf.mxu0
      %v863 = vadd.f32 0.0, %v862
      %v864 = vpop.f32.mrf.mxu0
      %865 = vmatprep.mubr.f32.mxu0 0.0
      %866 = vmatmul.mubr.f32.gmra.mxu0 %v528
      %v867 = vpop.f32.mrf.mxu0
      %v868 = vadd.f32 0.0, %v867
      %v869 = vpop.f32.mrf.mxu0
      %870 = vmatprep.mubr.f32.mxu0 0.0
      %871 = vmatmul.mubr.f32.gmra.mxu0 %v769
      %v872 = vpop.f32.mrf.mxu0
      %v873 = vadd.f32 0.0, %v872
      %v874 = vpop.f32.mrf.mxu0
      %875 = vdwg.mxu0
      %v876 = vadd.f32 %v754, %v838
      %v877 = vadd.f32 %v755, %v843
      %v878 = vadd.f32 %v756, %v848
      %v879 = vadd.f32 %v757, %v853
      %v880 = vadd.f32 %v758, %v858
      %v881 = vadd.f32 %v759, %v863
      %v882 = vadd.f32 %v760, %v868
      %v883 = vadd.f32 %v761, %v873
      %vm884 = vcmask 64512
      %885 = vst.msk [vmem:[%s311] sm:$0xff] %vm884, %v876
      %886 = vst.msk [vmem:[%s311 + $0x8] sm:$0xff] %vm884, %v877
      %887 = vst.msk [vmem:[%s311 + $0x10] sm:$0xff] %vm884, %v878
      %888 = vst.msk [vmem:[%s311 + $0x18] sm:$0xff] %vm884, %v879
      %889 = vst.msk [vmem:[%s311 + $0x20] sm:$0xff] %vm884, %v880
      %890 = vst.msk [vmem:[%s311 + $0x28] sm:$0xff] %vm884, %v881
      %891 = vst.msk [vmem:[%s311 + $0x30] sm:$0xff] %vm884, %v882
      %892 = vst.msk [vmem:[%s311 + $0x38] sm:$0xff] %vm884, %v883
      %s893 = smul.u32 8, %s20
      %p894 = scmp.lt.s32.totalorder %s19, 1
      %s895 = scalar_select %p894, %s19, 1
      %p896 = scmp.lt.s32.totalorder %s893, 7
      %s897 = scalar_select %p896, %s893, 7
      %s898 = smul.addr %s895, 8
      %s899 = sadd.s32 %s897, %s898
      %s900 = smul.addr %s899, 8
      %s901 = scalar_lea.vmem %s4, %s900
      // Predicated region
      $region37: #{downsample_forward.1} parent=35 // pred_check
        %p902 = pneg %p149
      $region38: #{downsample_forward.1} parent=35 // pred_check_branch
        %904 = sbr.rel (%p902) target = $region40
      $region39: #{downsample_forward.1} parent=35 // pred_region
        %s905 = smul.u32 8, %s20
      $region40: #{downsample_forward.1} parent=35 // pred_fallthru
        _
    $region36: #{downsample_forward.1} parent=5 // pred_fallthru
      _
    %p906 = scmp.le.s32.totalorder 2, %s10
    // Predicated region
    $region41: #{downsample_forward.1} parent=5 // pred_check
      %p907 = pneg %p906
    $region42: #{downsample_forward.1} parent=5 // pred_check_branch
      %909 = sbr.rel (%p907) target = $region44
    $region43: #{downsample_forward.1} parent=5 // pred_region
      %s910 = ssub.s32 %s10, 2
      // Predicated region
      $region45: #{downsample_forward.1} parent=43 // pred_check
        %p911 = pneg %p155
      $region46: #{downsample_forward.1} parent=43 // pred_check_branch
        %913 = sbr.rel (%p911) target = $region48
      $region47: #{downsample_forward.1} parent=43 // pred_region
        %s914 = smul.u32 8, %s22
        %p915 = scmp.lt.s32.totalorder %s21, 1
        %s916 = scalar_select %p915, %s21, 1
        %p917 = scmp.lt.s32.totalorder %s914, 7
        %s918 = scalar_select %p917, %s914, 7
        %s919 = smul.addr %s916, 8
        %s920 = sadd.s32 %s918, %s919
        %s921 = smul.addr %s920, 8
        %s922 = scalar_lea.vmem %s4, %s921
      $region48: #{downsample_forward.1} parent=43 // pred_fallthru
        _
    $region44: #{downsample_forward.1} parent=5 // pred_fallthru
      _
  $region6: #{downsample_forward.1} parent=0 // loop_footer
    %s14 = sadd.s32 1, %s10
  $region7: #{downsample_forward.1} parent=0 // loop_footer_branch
    %9 = sbr.rel target = $region3
  $region8: #{downsample_forward.1} parent=0 // loop_exit
    _

</llo_original>
